<compile_context>
chip_gen: v7x
topology: tpu7x:2x2x1
jax: 0.10.0
libtpu: 0.0.40
codegen_flags: <defaults>
</compile_context>

<pallas_src>
import functools
import math

import jax
import jax.numpy as jnp
from jax.experimental import pallas as pl
from jax.experimental.pallas import tpu as pltpu

LOG_2PI = math.log(2.0 * math.pi)
NEG_BIG = -1e30  # finite "-inf" for padded lanes: never poisons max/exp with NaNs


def _round_up(v, m):
    return (v + m - 1) // m * m


def dgmmc_kernel(x_ref, w_ref, aux_ref, scale_ref, bias_ref, out_ref, *,
                 nb_components, class_pad, prescaled, matmul_dtype):
    # x: (TB, D); w: (D, M*Cp); aux/scale/bias: (1, M*Cp); out: (TB, Cp)
    x = x_ref[...]                                               # f32 (TB, D)
    x2 = jnp.sum(x * x, axis=-1, keepdims=True)                  # (TB, 1)

    xm = x if x.dtype == matmul_dtype else x.astype(matmul_dtype)
    xw = jnp.dot(xm, w_ref[...], preferred_element_type=jnp.float32)   # (TB, M*Cp), MXU

    if prescaled:
        # f32 path: W columns are mu/bw, aux = bias + scale*||mu||^2.
        # min(.., bias) == bias + scale*max(d2, 0) since scale < 0 (cancellation clamp).
        lp = jnp.minimum(aux_ref[...] + scale_ref[...] * x2 + xw, bias_ref[...])
    else:
        # bf16-operand path: keep the unscaled expansion (don't amplify the bf16 cross term).
        d2 = jnp.maximum(x2 + aux_ref[...] - 2.0 * xw, 0.0)      # aux = ||mu||^2
        lp = bias_ref[...] + scale_ref[...] * d2

    Cp = class_pad
    M = nb_components

    # logsumexp over mixture components (log-priors/log-weights already folded into bias):
    # lane-aligned static 128-wide slices.
    if M == 1:
        log_cls = lp
    else:
        m_max = lp[:, 0:Cp]
        for m in range(1, M):
            m_max = jnp.maximum(m_max, lp[:, m * Cp:(m + 1) * Cp])
        s = jnp.exp(lp[:, 0:Cp] - m_max)
        for m in range(1, M):
            s = s + jnp.exp(lp[:, m * Cp:(m + 1) * Cp] - m_max)
        log_cls = m_max + jnp.log(s)                             # (TB, Cp)

    # Normalize over classes.  Padded class lanes sit near NEG_BIG and underflow to 0 here.
    row_max = jnp.max(log_cls, axis=-1, keepdims=True)
    lse = row_max + jnp.log(jnp.sum(jnp.exp(log_cls - row_max), axis=-1, keepdims=True))
    out_ref[...] = log_cls - lse                                 # lane-dense (TB, Cp) store


def dgmmc_spherical_forward(x, params, nb_classes, nb_components, *,
                            block_b=512, use_bf16_matmul=False):
    means = jnp.asarray(params["means"], jnp.float32)            # (C*M, D), class-major
    bandwidths = jnp.asarray(params["bandwidths"], jnp.float32)  # (C*M,)
    priors = jnp.asarray(params["priors"], jnp.float32)          # (C,)
    weights = params.get("weights")                              # (C*M,) if M > 1

    x = jnp.asarray(x, jnp.float32)
    B, D = x.shape
    C, M = nb_classes, nb_components
    Cp = _round_up(C, 128)              # lane-dense class axis
    Kp = M * Cp                          # fused, padded component*class axis

    # ---- parameter glue (plain JAX, once per call — NOT per grid step) ----
    bw = jnp.clip(bandwidths, 0.001, 100.0).reshape(C, M)        # bandwidth clamp constraint
    means_cm = means.reshape(C, M, D)                            # (C, M, D)
    if M > 1:
        logw = jax.nn.log_softmax(jnp.asarray(weights, jnp.float32).reshape(C, M), axis=1)
    else:
        logw = jnp.zeros((C, M), jnp.float32)
    logprior = jax.nn.log_softmax(priors)                        # (C,)

    scale_cm = -0.5 / bw                                         # (C, M)
    # const bias + log mixture weight + log prior (prior commutes with component logsumexp)
    const_cm = -0.5 * (D * LOG_2PI + D * jnp.log(bw)) + logw + logprior[:, None]
    mu2_cm = jnp.sum(means_cm * means_cm, axis=-1)               # (C, M)

    prescaled = not use_bf16_matmul
    matmul_dtype = jnp.bfloat16 if use_bf16_matmul else jnp.float32

    mu_mc = means_cm.transpose(1, 0, 2)                          # (M, C, D) component-major
    if prescaled:
        w_cols = mu_mc / bw.T[:, :, None]                        # columns = mu / bw
        aux_cm = const_cm + scale_cm * mu2_cm                    # bias2 (upper bound = const)
        aux_fill = NEG_BIG
    else:
        w_cols = mu_mc                                           # columns = mu
        aux_cm = mu2_cm                                          # ||mu||^2
        aux_fill = 0.0

    # Component-major, class-padded layout: column m*Cp + c holds (class c, component m).
    w_pad = jnp.zeros((M, Cp, D), jnp.float32).at[:, :C, :].set(w_cols)
    w_mat = w_pad.reshape(Kp, D).T.astype(matmul_dtype)          # (D, Kp)
    scale = jnp.zeros((M, Cp), jnp.float32).at[:, :C].set(scale_cm.T).reshape(1, Kp)
    bias = jnp.full((M, Cp), NEG_BIG, jnp.float32).at[:, :C].set(const_cm.T).reshape(1, Kp)
    aux = jnp.full((M, Cp), aux_fill, jnp.float32).at[:, :C].set(aux_cm.T).reshape(1, Kp)

    # ---- generation-aware batch tiling (v5e/v6e: 128 MiB VMEM, v7x: 64 MiB) ----
    try:
        phys_vmem = int(pltpu.get_tpu_info().vmem_capacity_bytes)
    except Exception:
        phys_vmem = 64 * 1024 * 1024                             # safe for every generation
    budget = phys_vmem * 3 // 4                                  # headroom for compiler scratch
    w_itemsize = 2 if use_bf16_matmul else 4
    fixed = D * Kp * w_itemsize + 3 * Kp * 4 + (1 << 16)         # single-buffered constants
    per_row = 4 * (2 * D + 2 * Cp + 4 * Kp)                      # x/out double-buffered + temps
    if budget > fixed:
        bb_max = max(8, ((budget - fixed) // per_row) // 8 * 8)
    else:
        bb_max = 8
    block_b = max(8, min(block_b, bb_max, _round_up(B, 8)))
    # v7x megacore: make sure the "parallel" batch axis has >= 2 steps when possible
    # (harmless on single-TC v5e/v6e: one extra ~0.35us grid step).
    if pl.cdiv(B, block_b) == 1 and B > 8:
        block_b = _round_up(pl.cdiv(B, 2), 8)
    grid = (pl.cdiv(B, block_b),)
    vmem_limit = int(min(max(fixed + per_row * block_b, 16 * 1024 * 1024), budget))

    cost = pl.CostEstimate(
        flops=2 * B * D * Kp,
        transcendentals=B * (M * Cp + 3 * Cp),
        bytes_accessed=4 * B * D + D * Kp * w_itemsize + 4 * B * Cp + 12 * Kp,
    )

    kernel = functools.partial(dgmmc_kernel, nb_components=M, class_pad=Cp,
                               prescaled=prescaled, matmul_dtype=matmul_dtype)

    def _call(single_buffer_consts):
        # Constant operands never change across grid steps (index_map -> (0, 0)), so
        # single-buffer them to halve their VMEM footprint.
        ckw = {"pipeline_mode": pl.Buffered(1)} if single_buffer_consts else {}
        in_specs = [
            pl.BlockSpec((block_b, D), lambda i: (i, 0)),               # x tile
            pl.BlockSpec((D, Kp), lambda i: (0, 0), **ckw),             # fused means matrix
            pl.BlockSpec((1, Kp), lambda i: (0, 0), **ckw),             # bias2 / ||mu||^2
            pl.BlockSpec((1, Kp), lambda i: (0, 0), **ckw),             # -0.5 / bw
            pl.BlockSpec((1, Kp), lambda i: (0, 0), **ckw),             # const + logw + logprior
        ]
        return pl.pallas_call(
            kernel,
            out_shape=jax.ShapeDtypeStruct((B, Cp), jnp.float32),
            grid=grid,
            in_specs=in_specs,
            out_specs=pl.BlockSpec((block_b, Cp), lambda i: (i, 0)),
            compiler_params=pltpu.CompilerParams(
                dimension_semantics=("parallel",),
                vmem_limit_bytes=vmem_limit,
            ),
            cost_estimate=cost,
        )(x, w_mat, aux, scale, bias)

    try:
        out = _call(True)
    except Exception:
        # Fallback if this JAX build rejects pipeline_mode=pl.Buffered(1); only a VMEM hint.
        out = _call(False)
    return out[:, :C]


def reference_forward(x, params, C, M):
    """Pure-JAX reference mirroring the PyTorch forward."""
    means = params["means"]
    bw = jnp.clip(params["bandwidths"], 0.001, 100.0)
    B, D = x.shape
    d2 = jnp.sum((x[:, None, :] - means[None, :, :]) ** 2, axis=-1)          # (B, K)
    log_prob = -0.5 * (D * LOG_2PI + D * jnp.log(bw)[None, :] + d2 / bw[None, :])
    if M > 1:
        logw = jax.nn.log_softmax(params["weights"].reshape(C, M), axis=1).reshape(C * M)
        log_prob = log_prob + logw[None, :]
        log_prob = jax.scipy.special.logsumexp(log_prob.reshape(B, C, M), axis=2)
    log_prob = log_prob + jax.nn.log_softmax(params["priors"])[None, :]
    return log_prob - jax.scipy.special.logsumexp(log_prob, axis=1, keepdims=True)


if __name__ == "__main__":
    # Small shapes consistent with the module: features_dim=32, nb_classes=4, nb_components=2
    B, D, C, M = 16, 32, 4, 2
    K = C * M

    key = jax.random.PRNGKey(0)
    k_x, k_mu = jax.random.split(key)
    x = jax.random.normal(k_x, (B, D), dtype=jnp.float32)

    # Deterministic parameter init mirroring __init__:
    #   means ~ randn(K, D); bandwidths = 0.15; priors = 1/C; weights = 1/M
    params = {
        "means": jax.random.normal(k_mu, (K, D), dtype=jnp.float32),
        "bandwidths": 0.15 * jnp.ones((K,), jnp.float32),
        "priors": (1.0 / C) * jnp.ones((C,), jnp.float32),
        "weights": (1.0 / M) * jnp.ones((K,), jnp.float32),
    }

    out = dgmmc_spherical_forward(x, params, C, M)
    out = jax.block_until_ready(out)

    ref = reference_forward(x, params, C, M)
    assert out.shape == (B, C)
    assert bool(jnp.all(jnp.isfinite(out)))
    # rows are normalized log-probabilities
    assert bool(jnp.allclose(jnp.exp(jax.scipy.special.logsumexp(out, axis=1)), 1.0, atol=1e-4))
    assert bool(jnp.allclose(out, ref, atol=1e-3, rtol=1e-3))

    # bf16-operand MXU path (perf option for v5e/v6e/v7x): exercised here, but only checked
    # for finiteness/normalization — the distance expansion with small bandwidths can exceed
    # the strict 1e-3 tolerance (see design notes); validate per-model before enabling.
    out_bf16 = jax.block_until_ready(
        dgmmc_spherical_forward(x, params, C, M, use_bf16_matmul=True))
    assert out_bf16.shape == (B, C)
    assert bool(jnp.all(jnp.isfinite(out_bf16)))
    assert bool(jnp.allclose(jnp.exp(jax.scipy.special.logsumexp(out_bf16, axis=1)), 1.0,
                             atol=1e-4))

    print("KERNEL_OK")
</pallas_src>

<mosaic_0001>
module attributes {stable_mosaic.version = 11 : i64} {
  func.func @dgmmc_kernel(%arg0: i32, %arg1: memref<8x32xf32, #tpu.memory_space<vmem>>, %arg2: memref<32x256xf32, #tpu.memory_space<vmem>>, %arg3: memref<1x256xf32, #tpu.memory_space<vmem>>, %arg4: memref<1x256xf32, #tpu.memory_space<vmem>>, %arg5: memref<1x256xf32, #tpu.memory_space<vmem>>, %arg6: memref<8x128xf32, #tpu.memory_space<vmem>>) attributes {dimension_semantics = [#tpu.dimension_semantics<parallel>], iteration_bounds = array<i64: 2>, scalar_prefetch = 0 : i64, scratch_operands = 0 : i64, tpu.core_type = #tpu.core_type<tc>, window_params = [{transform_indices = @transform_0, window_bounds = array<i64: 8, 32>}, {pipeline_mode = #tpu.pipeline_mode<synchronous>, transform_indices = @transform_1, window_bounds = array<i64: 32, 256>}, {pipeline_mode = #tpu.pipeline_mode<synchronous>, transform_indices = @transform_2, window_bounds = array<i64: 1, 256>}, {pipeline_mode = #tpu.pipeline_mode<synchronous>, transform_indices = @transform_3, window_bounds = array<i64: 1, 256>}, {pipeline_mode = #tpu.pipeline_mode<synchronous>, transform_indices = @transform_4, window_bounds = array<i64: 1, 256>}, {transform_indices = @transform_5, window_bounds = array<i64: 8, 128>}]} {
    %c0 = arith.constant 0 : index
    %c0_0 = arith.constant 0 : index
    %0 = vector.load %arg1[%c0, %c0_0] : memref<8x32xf32, #tpu.memory_space<vmem>>, vector<8x32xf32>
    %1 = arith.mulf %0, %0 : vector<8x32xf32>
    %cst = arith.constant dense<0.000000e+00> : vector<8xf32>
    %2 = vector.multi_reduction <add>, %1, %cst [1] : vector<8x32xf32> to vector<8xf32>
    %3 = vector.shape_cast %2 : vector<8xf32> to vector<8x1xf32>
    %c0_1 = arith.constant 0 : index
    %c0_2 = arith.constant 0 : index
    %4 = vector.load %arg2[%c0_1, %c0_2] : memref<32x256xf32, #tpu.memory_space<vmem>>, vector<32x256xf32>
    %cst_3 = arith.constant dense<0.000000e+00> : vector<8x256xf32>
    %5 = tpu.matmul %0, %4, %cst_3 {dimension_numbers = #tpu.dot_dimension_numbers<[1], [0], [0], [1], [0, 0, 1, 1], [], []>} : vector<8x32xf32>, vector<32x256xf32>, vector<8x256xf32> -> vector<8x256xf32>
    %c0_4 = arith.constant 0 : index
    %c0_5 = arith.constant 0 : index
    %6 = vector.load %arg3[%c0_4, %c0_5] : memref<1x256xf32, #tpu.memory_space<vmem>>, vector<1x256xf32>
    %c0_6 = arith.constant 0 : index
    %c0_7 = arith.constant 0 : index
    %7 = vector.load %arg4[%c0_6, %c0_7] : memref<1x256xf32, #tpu.memory_space<vmem>>, vector<1x256xf32>
    %8 = vector.broadcast %7 : vector<1x256xf32> to vector<8x256xf32>
    %9 = vector.broadcast %3 : vector<8x1xf32> to vector<8x256xf32>
    %10 = arith.mulf %8, %9 : vector<8x256xf32>
    %11 = vector.broadcast %6 : vector<1x256xf32> to vector<8x256xf32>
    %12 = arith.addf %11, %10 : vector<8x256xf32>
    %13 = arith.addf %12, %5 : vector<8x256xf32>
    %c0_8 = arith.constant 0 : index
    %c0_9 = arith.constant 0 : index
    %14 = vector.load %arg5[%c0_8, %c0_9] : memref<1x256xf32, #tpu.memory_space<vmem>>, vector<1x256xf32>
    %15 = vector.broadcast %14 : vector<1x256xf32> to vector<8x256xf32>
    %16 = arith.minimumf %13, %15 : vector<8x256xf32>
    %17 = vector.extract_strided_slice %16 {offsets = [0, 0], sizes = [8, 128], strides = [1, 1]} : vector<8x256xf32> to vector<8x128xf32>
    %18 = vector.extract_strided_slice %16 {offsets = [0, 128], sizes = [8, 128], strides = [1, 1]} : vector<8x256xf32> to vector<8x128xf32>
    %19 = arith.maximumf %17, %18 : vector<8x128xf32>
    %20 = vector.extract_strided_slice %16 {offsets = [0, 0], sizes = [8, 128], strides = [1, 1]} : vector<8x256xf32> to vector<8x128xf32>
    %21 = arith.subf %20, %19 : vector<8x128xf32>
    %22 = math.exp %21 : vector<8x128xf32>
    %23 = vector.extract_strided_slice %16 {offsets = [0, 128], sizes = [8, 128], strides = [1, 1]} : vector<8x256xf32> to vector<8x128xf32>
    %24 = arith.subf %23, %19 : vector<8x128xf32>
    %25 = math.exp %24 : vector<8x128xf32>
    %26 = arith.addf %22, %25 : vector<8x128xf32>
    %27 = math.log %26 : vector<8x128xf32>
    %28 = arith.addf %19, %27 : vector<8x128xf32>
    %cst_10 = arith.constant dense<0xFF800000> : vector<8xf32>
    %29 = vector.multi_reduction <maximumf>, %28, %cst_10 [1] : vector<8x128xf32> to vector<8xf32>
    %30 = vector.shape_cast %29 : vector<8xf32> to vector<8x1xf32>
    %31 = vector.broadcast %30 : vector<8x1xf32> to vector<8x128xf32>
    %32 = arith.subf %28, %31 : vector<8x128xf32>
    %33 = math.exp %32 : vector<8x128xf32>
    %cst_11 = arith.constant dense<0.000000e+00> : vector<8xf32>
    %34 = vector.multi_reduction <add>, %33, %cst_11 [1] : vector<8x128xf32> to vector<8xf32>
    %35 = vector.shape_cast %34 : vector<8xf32> to vector<8x1xf32>
    %36 = math.log %35 : vector<8x1xf32>
    %37 = arith.addf %30, %36 : vector<8x1xf32>
    %38 = vector.broadcast %37 : vector<8x1xf32> to vector<8x128xf32>
    %39 = arith.subf %28, %38 : vector<8x128xf32>
    %c0_12 = arith.constant 0 : index
    %c0_13 = arith.constant 0 : index
    %40 = vector.load %arg6[%c0_12, %c0_13] : memref<8x128xf32, #tpu.memory_space<vmem>>, vector<8x128xf32>
    tpu.vector_store %arg6[%c0_12, %c0_13], %39 {strides = array<i32>} : memref<8x128xf32, #tpu.memory_space<vmem>>, vector<8x128xf32>,
    return
  }
  func.func @transform_0(%arg0: i32) -> (i32, i32) {
    %c0_i32 = arith.constant 0 : i32
    %c0_i32_0 = arith.constant 0 : i32
    return %arg0, %c0_i32 : i32, i32
  }
  func.func @transform_1(%arg0: i32) -> (i32, i32) {
    %c0_i32 = arith.constant 0 : i32
    %c0_i32_0 = arith.constant 0 : i32
    %c0_i32_1 = arith.constant 0 : i32
    return %c0_i32, %c0_i32_0 : i32, i32
  }
  func.func @transform_2(%arg0: i32) -> (i32, i32) {
    %c0_i32 = arith.constant 0 : i32
    %c0_i32_0 = arith.constant 0 : i32
    %c0_i32_1 = arith.constant 0 : i32
    return %c0_i32, %c0_i32_0 : i32, i32
  }
  func.func @transform_3(%arg0: i32) -> (i32, i32) {
    %c0_i32 = arith.constant 0 : i32
    %c0_i32_0 = arith.constant 0 : i32
    %c0_i32_1 = arith.constant 0 : i32
    return %c0_i32, %c0_i32_0 : i32, i32
  }
  func.func @transform_4(%arg0: i32) -> (i32, i32) {
    %c0_i32 = arith.constant 0 : i32
    %c0_i32_0 = arith.constant 0 : i32
    %c0_i32_1 = arith.constant 0 : i32
    return %c0_i32, %c0_i32_0 : i32, i32
  }
  func.func @transform_5(%arg0: i32) -> (i32, i32) {
    %c0_i32 = arith.constant 0 : i32
    %c0_i32_0 = arith.constant 0 : i32
    return %arg0, %c0_i32 : i32, i32
  }
}

module attributes {stable_mosaic.version = 11 : i64} {
  func.func @dgmmc_kernel(%arg0: i32, %arg1: memref<8x32xf32, #tpu.memory_space<vmem>>, %arg2: memref<32x256xf32, #tpu.memory_space<vmem>>, %arg3: memref<1x256xf32, #tpu.memory_space<vmem>>, %arg4: memref<1x256xf32, #tpu.memory_space<vmem>>, %arg5: memref<1x256xf32, #tpu.memory_space<vmem>>, %arg6: memref<8x128xf32, #tpu.memory_space<vmem>>) attributes {dimension_semantics = [#tpu.dimension_semantics<parallel>], iteration_bounds = array<i64: 2>, scalar_prefetch = 0 : i64, scratch_operands = 0 : i64, tpu.core_type = #tpu.core_type<tc>, window_params = [{transform_indices = @transform_0, window_bounds = array<i64: 8, 32>}, {pipeline_mode = #tpu.pipeline_mode<synchronous>, transform_indices = @transform_1, window_bounds = array<i64: 32, 256>}, {pipeline_mode = #tpu.pipeline_mode<synchronous>, transform_indices = @transform_2, window_bounds = array<i64: 1, 256>}, {pipeline_mode = #tpu.pipeline_mode<synchronous>, transform_indices = @transform_3, window_bounds = array<i64: 1, 256>}, {pipeline_mode = #tpu.pipeline_mode<synchronous>, transform_indices = @transform_4, window_bounds = array<i64: 1, 256>}, {transform_indices = @transform_5, window_bounds = array<i64: 8, 128>}]} {
    %c0 = arith.constant 0 : index
    %c0_0 = arith.constant 0 : index
    %0 = vector.load %arg1[%c0, %c0_0] : memref<8x32xf32, #tpu.memory_space<vmem>>, vector<8x32xf32>
    %1 = arith.mulf %0, %0 : vector<8x32xf32>
    %cst = arith.constant dense<0.000000e+00> : vector<8xf32>
    %2 = vector.multi_reduction <add>, %1, %cst [1] : vector<8x32xf32> to vector<8xf32>
    %3 = vector.shape_cast %2 : vector<8xf32> to vector<8x1xf32>
    %c0_1 = arith.constant 0 : index
    %c0_2 = arith.constant 0 : index
    %4 = vector.load %arg2[%c0_1, %c0_2] : memref<32x256xf32, #tpu.memory_space<vmem>>, vector<32x256xf32>
    %cst_3 = arith.constant dense<0.000000e+00> : vector<8x256xf32>
    %5 = tpu.matmul %0, %4, %cst_3 {dimension_numbers = #tpu.dot_dimension_numbers<[1], [0], [0], [1], [0, 0, 1, 1], [], []>} : vector<8x32xf32>, vector<32x256xf32>, vector<8x256xf32> -> vector<8x256xf32>
    %c0_4 = arith.constant 0 : index
    %c0_5 = arith.constant 0 : index
    %6 = vector.load %arg3[%c0_4, %c0_5] : memref<1x256xf32, #tpu.memory_space<vmem>>, vector<1x256xf32>
    %c0_6 = arith.constant 0 : index
    %c0_7 = arith.constant 0 : index
    %7 = vector.load %arg4[%c0_6, %c0_7] : memref<1x256xf32, #tpu.memory_space<vmem>>, vector<1x256xf32>
    %8 = vector.broadcast %7 : vector<1x256xf32> to vector<8x256xf32>
    %9 = vector.broadcast %3 : vector<8x1xf32> to vector<8x256xf32>
    %10 = arith.mulf %8, %9 : vector<8x256xf32>
    %11 = vector.broadcast %6 : vector<1x256xf32> to vector<8x256xf32>
    %12 = arith.addf %11, %10 : vector<8x256xf32>
    %13 = arith.addf %12, %5 : vector<8x256xf32>
    %c0_8 = arith.constant 0 : index
    %c0_9 = arith.constant 0 : index
    %14 = vector.load %arg5[%c0_8, %c0_9] : memref<1x256xf32, #tpu.memory_space<vmem>>, vector<1x256xf32>
    %15 = vector.broadcast %14 : vector<1x256xf32> to vector<8x256xf32>
    %16 = arith.minimumf %13, %15 : vector<8x256xf32>
    %17 = vector.extract_strided_slice %16 {offsets = [0, 0], sizes = [8, 128], strides = [1, 1]} : vector<8x256xf32> to vector<8x128xf32>
    %18 = vector.extract_strided_slice %16 {offsets = [0, 128], sizes = [8, 128], strides = [1, 1]} : vector<8x256xf32> to vector<8x128xf32>
    %19 = arith.maximumf %17, %18 : vector<8x128xf32>
    %20 = vector.extract_strided_slice %16 {offsets = [0, 0], sizes = [8, 128], strides = [1, 1]} : vector<8x256xf32> to vector<8x128xf32>
    %21 = arith.subf %20, %19 : vector<8x128xf32>
    %22 = math.exp %21 : vector<8x128xf32>
    %23 = vector.extract_strided_slice %16 {offsets = [0, 128], sizes = [8, 128], strides = [1, 1]} : vector<8x256xf32> to vector<8x128xf32>
    %24 = arith.subf %23, %19 : vector<8x128xf32>
    %25 = math.exp %24 : vector<8x128xf32>
    %26 = arith.addf %22, %25 : vector<8x128xf32>
    %27 = math.log %26 : vector<8x128xf32>
    %28 = arith.addf %19, %27 : vector<8x128xf32>
    %cst_10 = arith.constant dense<0xFF800000> : vector<8xf32>
    %29 = vector.multi_reduction <maximumf>, %28, %cst_10 [1] : vector<8x128xf32> to vector<8xf32>
    %30 = vector.shape_cast %29 : vector<8xf32> to vector<8x1xf32>
    %31 = vector.broadcast %30 : vector<8x1xf32> to vector<8x128xf32>
    %32 = arith.subf %28, %31 : vector<8x128xf32>
    %33 = math.exp %32 : vector<8x128xf32>
    %cst_11 = arith.constant dense<0.000000e+00> : vector<8xf32>
    %34 = vector.multi_reduction <add>, %33, %cst_11 [1] : vector<8x128xf32> to vector<8xf32>
    %35 = vector.shape_cast %34 : vector<8xf32> to vector<8x1xf32>
    %36 = math.log %35 : vector<8x1xf32>
    %37 = arith.addf %30, %36 : vector<8x1xf32>
    %38 = vector.broadcast %37 : vector<8x1xf32> to vector<8x128xf32>
    %39 = arith.subf %28, %38 : vector<8x128xf32>
    %c0_12 = arith.constant 0 : index
    %c0_13 = arith.constant 0 : index
    %40 = vector.load %arg6[%c0_12, %c0_13] : memref<8x128xf32, #tpu.memory_space<vmem>>, vector<8x128xf32>
    tpu.vector_store %arg6[%c0_12, %c0_13], %39 {strides = array<i32>} : memref<8x128xf32, #tpu.memory_space<vmem>>, vector<8x128xf32>,
    return
  }
  func.func @transform_0(%arg0: i32) -> (i32, i32) {
    %c0_i32 = arith.constant 0 : i32
    %c0_i32_0 = arith.constant 0 : i32
    return %arg0, %c0_i32 : i32, i32
  }
  func.func @transform_1(%arg0: i32) -> (i32, i32) {
    %c0_i32 = arith.constant 0 : i32
    %c0_i32_0 = arith.constant 0 : i32
    %c0_i32_1 = arith.constant 0 : i32
    return %c0_i32, %c0_i32_0 : i32, i32
  }
  func.func @transform_2(%arg0: i32) -> (i32, i32) {
    %c0_i32 = arith.constant 0 : i32
    %c0_i32_0 = arith.constant 0 : i32
    %c0_i32_1 = arith.constant 0 : i32
    return %c0_i32, %c0_i32_0 : i32, i32
  }
  func.func @transform_3(%arg0: i32) -> (i32, i32) {
    %c0_i32 = arith.constant 0 : i32
    %c0_i32_0 = arith.constant 0 : i32
    %c0_i32_1 = arith.constant 0 : i32
    return %c0_i32, %c0_i32_0 : i32, i32
  }
  func.func @transform_4(%arg0: i32) -> (i32, i32) {
    %c0_i32 = arith.constant 0 : i32
    %c0_i32_0 = arith.constant 0 : i32
    %c0_i32_1 = arith.constant 0 : i32
    return %c0_i32, %c0_i32_0 : i32, i32
  }
  func.func @transform_5(%arg0: i32) -> (i32, i32) {
    %c0_i32 = arith.constant 0 : i32
    %c0_i32_0 = arith.constant 0 : i32
    return %arg0, %c0_i32 : i32, i32
  }
}

</mosaic_0001>

<llo_original>
// kernel: tpu_custom_call.1
$region0: #{tpu_custom_call.1}
  #allocation0 [shape = 'u32[]', space=smem, size = 0x4, offset = 0x4, fixed_abs, tag = 'smem constant byte address 0x4 - core index']
  #allocation1 [shape = 'u32[144,128]{1,0:T(1,128)}', space=vmem, size = 0x12000, scoped, tag = 'internal scratch']
  %s0 = inlined_call_operand.hbm [shape: f32[16,32], index: 0, kind: input, shape index: {}]
  %s1 = inlined_call_operand.hbm [shape: f32[32,256], index: 1, kind: input, shape index: {}]
  %s2 = inlined_call_operand.vmem [shape: f32[1,256], index: 2, kind: input, shape index: {}]
  %s3 = inlined_call_operand.vmem [shape: f32[1,256], index: 3, kind: input, shape index: {}]
  %s4 = inlined_call_operand.vmem [shape: f32[1,256], index: 4, kind: input, shape index: {}]
  %s5 = inlined_call_operand.hbm [shape: f32[16,128], index: 5, kind: output, shape index: {}]
  %s6 = sld [smem:[#allocation0]]
  $region61: #{tpu_custom_call.1} parent=0
    _
  %s8 = ssub.s32 1, %s6
  %s9 = scalar_select 0, %s8, %s6
  $region1: #{tpu_custom_call.1} parent=0
    #allocation2 [shape = 'u8[8192]{0}', space=vmem, size = 0x2000, scoped, tag = 'input window, operand 0']
    #allocation3 [shape = 's32[2]{0}', space=sflag, size = 0x8, scoped, tag = 'scoped memory for tpu_custom_call.1']
    #allocation4 [shape = 's32[2]{0}', space=sflag, size = 0x8, scoped, tag = 'scoped memory for tpu_custom_call.1']
    #allocation5 [shape = 'u8[32768]{0}', space=vmem, size = 0x8000, scoped, tag = 'input window, operand 1, single buffered']
    #allocation6 [shape = 's32[1]{0}', space=sflag, size = 0x4, scoped, tag = 'scoped memory for tpu_custom_call.1']
    #allocation7 [shape = 'u8[8192]{0}', space=vmem, size = 0x2000, scoped, tag = 'output window, operand 0']
    %10 = vsyncpa [#allocation3], 0
    %s11 = scalar_lea.sflag [#allocation3], 1
    %12 = vsyncpa %s11, 0
    %13 = vsyncpa [#allocation6], 0
    %14 = vsyncpa [#allocation4], 0
    %s15 = scalar_lea.sflag [#allocation4], 1
    %16 = vsyncpa %s15, 0
    loop: start=0, step=1, limit=4
    $region2: #{tpu_custom_call.1} parent=1 // loop_pre_header
      _
    $region3: #{tpu_custom_call.1} parent=1 // loop_header
      %s18 = sphi 0, %s22
      %p19 = scmp.ge.s32.totalorder %s18, 4
      %s28 = sphi 0, %s30
      %s31 = sphi 0, %s28
      %s32 = sphi 0, %s31
      %s48 = sphi 0, %s32
      %s52 = sphi 0, %s52
      %s54 = sphi 0, %s52
      %s55 = sphi 0, %s54
      %s69 = sphi 0, %s55
      %s73 = sphi 0, %s73
      %s75 = sphi 0, %s73
      %s76 = sphi 0, %s75
      %s90 = sphi 0, %s76
      %s94 = sphi 0, %s94
      %s96 = sphi 0, %s94
      %s97 = sphi 0, %s96
      %s111 = sphi 0, %s97
      %s115 = sphi 0, %s115
      %s117 = sphi 0, %s115
      %s118 = sphi 0, %s117
      %s132 = sphi 0, %s118
      %s138 = sphi 0, %s140
      %s141 = sphi 0, %s138
      %s142 = sphi 0, %s141
      %s158 = sphi 0, %s142
    $region4: #{tpu_custom_call.1} parent=1 // loop_header_branch
      %21 = sbr.rel (%p19) target = $region8
    $region5: #{tpu_custom_call.1} parent=1 // loop_body
      %s23 = ssub.s32 %s18, 1
      %s24 = ssub.s32 %s18, 2
      %s25 = sadd.s32 %s18, 1
      %s26 = ssub.s32 %s18, %s25
      %p27 = scmp.eq.s32.totalorder %s26, 0
      %s29 = sadd.s32 %s28, 1
      %s30 = scalar_select %p27, %s28, %s29
      %p33 = pneg %p27
      %p34 = scmp.eq.s32.totalorder %s18, 1
      %p35 = por %p33, %p34
      %p36 = scmp.ne.s32.totalorder %s28, %s31
      %p37 = scmp.eq.s32.totalorder %s18, 0
      %p38 = por %p36, %p37
      %p39 = scmp.ne.s32.totalorder %s28, %s31
      %p40 = scmp.eq.s32.totalorder %s23, 1
      %p41 = por %p39, %p40
      %p42 = scmp.ne.s32.totalorder %s31, %s32
      %p43 = scmp.eq.s32.totalorder %s23, 0
      %p44 = por %p42, %p43
      %p45 = scmp.ne.s32.totalorder %s31, %s32
      %p46 = scmp.eq.s32.totalorder %s24, 1
      %p47 = por %p45, %p46
      %p49 = scmp.ne.s32.totalorder %s32, %s48
      %p50 = scmp.eq.s32.totalorder %s24, 0
      %p51 = por %p49, %p50
      %s53 = sadd.s32 %s52, 1
      %p56 = scmp.eq.s32.totalorder %s18, 1
      %p57 = scmp.ne.s32.totalorder %s52, %s54
      %p58 = scmp.eq.s32.totalorder %s18, 0
      %p59 = por %p57, %p58
      %p60 = scmp.ne.s32.totalorder %s52, %s54
      %p61 = scmp.eq.s32.totalorder %s23, 1
      %p62 = por %p60, %p61
      %p63 = scmp.ne.s32.totalorder %s54, %s55
      %p64 = scmp.eq.s32.totalorder %s23, 0
      %p65 = por %p63, %p64
      %p66 = scmp.ne.s32.totalorder %s54, %s55
      %p67 = scmp.eq.s32.totalorder %s24, 1
      %p68 = por %p66, %p67
      %p70 = scmp.ne.s32.totalorder %s55, %s69
      %p71 = scmp.eq.s32.totalorder %s24, 0
      %p72 = por %p70, %p71
      %s74 = sadd.s32 %s73, 1
      %p77 = scmp.eq.s32.totalorder %s18, 1
      %p78 = scmp.ne.s32.totalorder %s73, %s75
      %p79 = scmp.eq.s32.totalorder %s18, 0
      %p80 = por %p78, %p79
      %p81 = scmp.ne.s32.totalorder %s73, %s75
      %p82 = scmp.eq.s32.totalorder %s23, 1
      %p83 = por %p81, %p82
      %p84 = scmp.ne.s32.totalorder %s75, %s76
      %p85 = scmp.eq.s32.totalorder %s23, 0
      %p86 = por %p84, %p85
      %p87 = scmp.ne.s32.totalorder %s75, %s76
      %p88 = scmp.eq.s32.totalorder %s24, 1
      %p89 = por %p87, %p88
      %p91 = scmp.ne.s32.totalorder %s76, %s90
      %p92 = scmp.eq.s32.totalorder %s24, 0
      %p93 = por %p91, %p92
      %s95 = sadd.s32 %s94, 1
      %p98 = scmp.eq.s32.totalorder %s18, 1
      %p99 = scmp.ne.s32.totalorder %s94, %s96
      %p100 = scmp.eq.s32.totalorder %s18, 0
      %p101 = por %p99, %p100
      %p102 = scmp.ne.s32.totalorder %s94, %s96
      %p103 = scmp.eq.s32.totalorder %s23, 1
      %p104 = por %p102, %p103
      %p105 = scmp.ne.s32.totalorder %s96, %s97
      %p106 = scmp.eq.s32.totalorder %s23, 0
      %p107 = por %p105, %p106
      %p108 = scmp.ne.s32.totalorder %s96, %s97
      %p109 = scmp.eq.s32.totalorder %s24, 1
      %p110 = por %p108, %p109
      %p112 = scmp.ne.s32.totalorder %s97, %s111
      %p113 = scmp.eq.s32.totalorder %s24, 0
      %p114 = por %p112, %p113
      %s116 = sadd.s32 %s115, 1
      %p119 = scmp.eq.s32.totalorder %s18, 1
      %p120 = scmp.ne.s32.totalorder %s115, %s117
      %p121 = scmp.eq.s32.totalorder %s18, 0
      %p122 = por %p120, %p121
      %p123 = scmp.ne.s32.totalorder %s115, %s117
      %p124 = scmp.eq.s32.totalorder %s23, 1
      %p125 = por %p123, %p124
      %p126 = scmp.ne.s32.totalorder %s117, %s118
      %p127 = scmp.eq.s32.totalorder %s23, 0
      %p128 = por %p126, %p127
      %p129 = scmp.ne.s32.totalorder %s117, %s118
      %p130 = scmp.eq.s32.totalorder %s24, 1
      %p131 = por %p129, %p130
      %p133 = scmp.ne.s32.totalorder %s118, %s132
      %p134 = scmp.eq.s32.totalorder %s24, 0
      %p135 = por %p133, %p134
      %s136 = ssub.s32 %s18, %s25
      %p137 = scmp.eq.s32.totalorder %s136, 0
      %s139 = sadd.s32 %s138, 1
      %s140 = scalar_select %p137, %s138, %s139
      %p143 = pneg %p137
      %p144 = scmp.eq.s32.totalorder %s18, 1
      %p145 = por %p143, %p144
      %p146 = scmp.ne.s32.totalorder %s138, %s141
      %p147 = scmp.eq.s32.totalorder %s18, 0
      %p148 = por %p146, %p147
      %p149 = scmp.ne.s32.totalorder %s138, %s141
      %p150 = scmp.eq.s32.totalorder %s23, 1
      %p151 = por %p149, %p150
      %p152 = scmp.ne.s32.totalorder %s141, %s142
      %p153 = scmp.eq.s32.totalorder %s23, 0
      %p154 = por %p152, %p153
      %p155 = scmp.ne.s32.totalorder %s141, %s142
      %p156 = scmp.eq.s32.totalorder %s24, 1
      %p157 = por %p155, %p156
      %p159 = scmp.ne.s32.totalorder %s142, %s158
      %p160 = scmp.eq.s32.totalorder %s24, 0
      %p161 = por %p159, %p160
      %p162 = scmp.le.s32.totalorder 1, %s18
      %p163 = scmp.lt.s32.totalorder %s18, 3
      %p164 = pnand %p162, %p163
      %p165 = pneg %p164
      // Predicated region
      $region9: #{tpu_custom_call.1} parent=5 // pred_check
        _
      $region10: #{tpu_custom_call.1} parent=5 // pred_check_branch
        %167 = sbr.rel (%p164) target = $region12
      $region11: #{tpu_custom_call.1} parent=5 // pred_region
        %s168 = ssub.s32 %s18, 1
        // Predicated region
        $region13: #{tpu_custom_call.1} parent=11 // pred_check
          %p169 = pneg %p65
        $region14: #{tpu_custom_call.1} parent=11 // pred_check_branch
          %171 = sbr.rel (%p169) target = $region16
        $region15: #{tpu_custom_call.1} parent=11 // pred_region
          %s173 = ssub.s32 1024, 1024
          %174 = vsyncadd [#allocation6], %s173
          %s175 = sshll.u32 [#allocation5], 4
          %s176 = int_to_ptr.vmem [resolvable:$true] %s175
          %181 = dma.hbm_to_vmem [thread:$0]  %s1, 1024, %s176, [#allocation6], 256, 256, 16
        $region16: #{tpu_custom_call.1} parent=11 // pred_fallthru
          _
        // Predicated region
        $region17: #{tpu_custom_call.1} parent=11 // pred_check
          %p182 = pneg %p86
        $region18: #{tpu_custom_call.1} parent=11 // pred_check_branch
          %184 = sbr.rel (%p182) target = $region20
        $region19: #{tpu_custom_call.1} parent=11 // pred_region
          _
        $region20: #{tpu_custom_call.1} parent=11 // pred_fallthru
          _
        // Predicated region
        $region21: #{tpu_custom_call.1} parent=11 // pred_check
          %p185 = pneg %p107
        $region22: #{tpu_custom_call.1} parent=11 // pred_check_branch
          %187 = sbr.rel (%p185) target = $region24
        $region23: #{tpu_custom_call.1} parent=11 // pred_region
          _
        $region24: #{tpu_custom_call.1} parent=11 // pred_fallthru
          _
        // Predicated region
        $region25: #{tpu_custom_call.1} parent=11 // pred_check
          %p188 = pneg %p128
        $region26: #{tpu_custom_call.1} parent=11 // pred_check_branch
          %190 = sbr.rel (%p188) target = $region28
        $region27: #{tpu_custom_call.1} parent=11 // pred_region
          _
        $region28: #{tpu_custom_call.1} parent=11 // pred_fallthru
          _
      $region12: #{tpu_custom_call.1} parent=5 // pred_fallthru
        _
      %p191 = scmp.lt.s32.totalorder %s18, 2
      // Predicated region
      $region29: #{tpu_custom_call.1} parent=5 // pred_check
        %p192 = pneg %p191
      $region30: #{tpu_custom_call.1} parent=5 // pred_check_branch
        %194 = sbr.rel (%p192) target = $region32
      $region31: #{tpu_custom_call.1} parent=5 // pred_region
        // Predicated region
        $region33: #{tpu_custom_call.1} parent=31 // pred_check
          %p195 = pneg %p38
        $region34: #{tpu_custom_call.1} parent=31 // pred_check_branch
          %197 = sbr.rel (%p195) target = $region36
        $region35: #{tpu_custom_call.1} parent=31 // pred_region
          %s198 = sand.u32 %s28, 1
          %s199 = scalar_lea.sflag [#allocation3], %s198
          %s200 = sand.u32 %s28, 1
          %s201 = smul.addr %s200, 8
          %s202 = scalar_lea.vmem [#allocation2], %s201
          %s204 = ssub.s32 128, 128
          %205 = vsyncadd %s199, %s204
          %s206 = smul.addr %s18, 128
          %s207 = scalar_lea.hbm %s0, %s206
          %s209 = sshll.u32 %s202, 4
          %s210 = int_to_ptr.vmem [resolvable:$true] %s209
          %212 = dma.hbm_to_vmem [thread:$0]  %s207, 128, %s210, %s199
        $region36: #{tpu_custom_call.1} parent=31 // pred_fallthru
          _
      $region32: #{tpu_custom_call.1} parent=5 // pred_fallthru
        _
      %p213 = scmp.le.s32.totalorder 1, %s18
      %p214 = scmp.lt.s32.totalorder %s18, 3
      %p215 = pnand %p213, %p214
      %p216 = pneg %p215
      // Predicated region
      $region37: #{tpu_custom_call.1} parent=5 // pred_check
        _
      $region38: #{tpu_custom_call.1} parent=5 // pred_check_branch
        %218 = sbr.rel (%p215) target = $region40
      $region39: #{tpu_custom_call.1} parent=5 // pred_region
        %s219 = ssub.s32 %s18, 1
        %s220 = sand.u32 %s31, 1
        %s221 = scalar_lea.sflag [#allocation3], %s220
        %s222 = sand.u32 %s31, 1
        %s223 = smul.addr %s222, 8
        %s224 = scalar_lea.vmem [#allocation2], %s223
        // Predicated region
        $region41: #{tpu_custom_call.1} parent=39 // pred_check
          %p225 = pneg %p44
        $region42: #{tpu_custom_call.1} parent=39 // pred_check_branch
          %227 = sbr.rel (%p225) target = $region44
        $region43: #{tpu_custom_call.1} parent=39 // pred_region
          %228 = dma.done %s221, 128
        $region44: #{tpu_custom_call.1} parent=39 // pred_fallthru
          _
        // Predicated region
        $region45: #{tpu_custom_call.1} parent=39 // pred_check
          %p229 = pneg %p65
        $region46: #{tpu_custom_call.1} parent=39 // pred_check_branch
          %231 = sbr.rel (%p229) target = $region48
        $region47: #{tpu_custom_call.1} parent=39 // pred_region
          %232 = dma.done [#allocation6], 1024
        $region48: #{tpu_custom_call.1} parent=39 // pred_fallthru
          _
        %s233 = sand.u32 %s31, 1
        %s234 = scalar_lea.sflag [#allocation3], %s233
        %s235 = sand.u32 %s31, 1
        %s236 = smul.addr %s235, 8
        %s237 = scalar_lea.vmem [#allocation2], %s236
        %p238 = pneg %p44
        %p239 = pneg %p41
        %p240 = pneg %p65
        %p241 = pneg %p62
        %p242 = pneg %p86
        %p243 = pneg %p83
        %p244 = pneg %p107
        %p245 = pneg %p104
        %p246 = pneg %p128
        %p247 = pneg %p125
        %p248 = pneg %p154
        %p249 = pneg %p151
        %s250 = sand.u32 %s141, 1
        %s251 = scalar_lea.sflag [#allocation4], %s250
        %s252 = sand.u32 %s141, 1
        %s253 = smul.addr %s252, 8
        %s254 = scalar_lea.vmem [#allocation7], %s253
        %v255 = vld [vmem:[%s224] sm:$0xff]
        %v256 = vmul.f32 %v255, %v255
        %vm257 = vcmask 261120
        %v258 = vsel %vm257, %v256, 0.0
        %259 = vadd.xlane.f32.xlu0 %v258
        %v260 = vpop.xlane.xlu0 %259
        %v261 = vld [vmem:[#allocation5] sm:$0xff]
        %v262 = vld [vmem:[#allocation5 + $0x8] sm:$0xff]
        %v263 = vld [vmem:[#allocation5 + $0x10] sm:$0xff]
        %v264 = vld [vmem:[#allocation5 + $0x18] sm:$0xff]
        %v265 = vld [vmem:[#allocation5 + $0x20] sm:$0xff]
        %v266 = vld [vmem:[#allocation5 + $0x28] sm:$0xff]
        %v267 = vld [vmem:[#allocation5 + $0x30] sm:$0xff]
        %v268 = vld [vmem:[#allocation5 + $0x38] sm:$0xff]
        %v270 = vsel %vm257, %v255, 0
        %272 = vmatprep.subr.mxu0 %v262
        %273 = vmatpush1.msra.mxu0 %v261
        %274 = vmatprep.subr.mxu0 %v264
        %275 = vmatpush1.msra.mxu0 %v263
        %276 = vmatprep.subr.mxu0 %v266
        %277 = vmatpush1.msra.mxu0 %v265
        %278 = vmatprep.subr.mxu0 %v268
        %279 = vmatpush1.msra.mxu0 %v267
        %280 = vmatprep.subr.mxu0 0.0
        %281 = vmatpush1.msra.mxu0 0.0
        %282 = vmatprep.subr.mxu0 0.0
        %283 = vmatpush1.msra.mxu0 0.0
        %284 = vmatprep.subr.mxu0 0.0
        %285 = vmatpush1.msra.mxu0 0.0
        %286 = vmatprep.subr.mxu0 0.0
        %287 = vmatpush1.msra.mxu0 0.0
        %288 = vmatprep.subr.mxu0 0.0
        %289 = vmatpush1.msra.mxu0 0.0
        %290 = vmatprep.subr.mxu0 0.0
        %291 = vmatpush1.msra.mxu0 0.0
        %292 = vmatprep.subr.mxu0 0.0
        %293 = vmatpush1.msra.mxu0 0.0
        %294 = vmatprep.subr.mxu0 0.0
        %295 = vmatpush1.msra.mxu0 0.0
        %296 = vmatprep.subr.mxu0 0.0
        %297 = vmatpush1.msra.mxu0 0.0
        %298 = vmatprep.subr.mxu0 0.0
        %299 = vmatpush1.msra.mxu0 0.0
        %300 = vmatprep.subr.mxu0 0.0
        %301 = vmatpush1.msra.mxu0 0.0
        %302 = vmatprep.subr.mxu0 0.0
        %303 = vmatpush1.msra.mxu0 0.0
        %304 = vmatprep.subr.mxu0 0.0
        %305 = vmatpush1.msra.mxu0 0.0
        %306 = vmatprep.subr.mxu0 0.0
        %307 = vmatpush1.msra.mxu0 0.0
        %308 = vmatprep.subr.mxu0 0.0
        %309 = vmatpush1.msra.mxu0 0.0
        %310 = vmatprep.subr.mxu0 0.0
        %311 = vmatpush1.msra.mxu0 0.0
        %312 = vmatprep.subr.mxu0 0.0
        %313 = vmatpush1.msra.mxu0 0.0
        %314 = vmatprep.subr.mxu0 0.0
        %315 = vmatpush1.msra.mxu0 0.0
        %316 = vmatprep.subr.mxu0 0.0
        %317 = vmatpush1.msra.mxu0 0.0
        %318 = vmatprep.subr.mxu0 0.0
        %319 = vmatpush1.msra.mxu0 0.0
        %320 = vmatprep.subr.mxu0 0.0
        %321 = vmatpush1.msra.mxu0 0.0
        %322 = vmatprep.subr.mxu0 0.0
        %323 = vmatpush1.msra.mxu0 0.0
        %324 = vmatprep.subr.mxu0 0.0
        %325 = vmatpush1.msra.mxu0 0.0
        %326 = vmatprep.subr.mxu0 0.0
        %327 = vmatpush1.msra.mxu0 0.0
        %328 = vmatprep.subr.mxu0 0.0
        %329 = vmatpush1.msra.mxu0 0.0
        %330 = vmatprep.subr.mxu0 0.0
        %331 = vmatpush1.msra.mxu0 0.0
        %332 = vmatprep.subr.mxu0 0.0
        %333 = vmatpush1.msra.mxu0 0.0
        %334 = vmatprep.subr.mxu0 0.0
        %335 = vmatpush1.msra.mxu0 0.0
        %336 = vmatprep.mubr.f32.mxu0 0.0
        %337 = vmatmul.mubr.f32.gmra.mrb[0].mxu0 %v270
        %v338 = vpop.f32.mrb[0].mxu0
        %v339 = vadd.f32 0.0, %v338
        %v340 = vpop.f32.mrb[0].mxu0
        %v341 = vadd.f32 0.0, %v340
        %342 = vdwg.mxu0
        %v343 = vld [vmem:[%s2] sm:$0x3]
        %v344 = vld [vmem:[%s3] sm:$0x3]
        %v346 = vlaneseq
        %v347 = vshrl.u32 %v346, 7
        %v348 = vsub.s32 0, %v347
        %v349 = vrot.slane %v344, %v348
        %v350 = vlaneseq
        %v351 = vshrl.u32 %v350, 7
        %v352 = vsub.s32 1, %v351
        %v353 = vrot.slane %v344, %v352
        %v356 = vmul.f32 %v349, %v260
        %v357 = vmul.f32 %v353, %v260
        %v359 = vlaneseq
        %v360 = vshrl.u32 %v359, 7
        %v361 = vsub.s32 0, %v360
        %v362 = vrot.slane %v343, %v361
        %v363 = vlaneseq
        %v364 = vshrl.u32 %v363, 7
        %v365 = vsub.s32 1, %v364
        %v366 = vrot.slane %v343, %v365
        %v369 = vadd.f32 %v362, %v356
        %v370 = vadd.f32 %v366, %v357
        %v371 = vadd.f32 %v369, %v339
        %v372 = vadd.f32 %v370, %v341
        %v373 = vld [vmem:[%s4] sm:$0x3]
        %v375 = vlaneseq
        %v376 = vshrl.u32 %v375, 7
        %v377 = vsub.s32 0, %v376
        %v378 = vrot.slane %v373, %v377
        %v379 = vlaneseq
        %v380 = vshrl.u32 %v379, 7
        %v381 = vsub.s32 1, %v380
        %v382 = vrot.slane %v373, %v381
        %v385 = vmin.f32 %v371, %v378
        %v386 = vmin.f32 %v372, %v382
        %v387 = vmax.f32 %v385, %v386
        %v388 = vsub.f32 %v385, %v387
        %v389 = vmul.f32 %v388, 1.442695
        %v390 = vpow.pop %v389
        %v391 = vsub.f32 %v386, %v387
        %v392 = vmul.f32 %v391, 1.442695
        %v393 = vpow.pop %v392
        %v394 = vadd.f32 %v390, %v393
        %v395 = vlog2.pop %v394
        %v396 = vmul.f32 %v395, 0.6931472
        %v397 = vadd.f32 %v387, %v396
        %398 = vmax.xlane.f32.xlu0 %v397
        %v399 = vpop.xlane.xlu0 %398
        %v400 = vsub.f32 %v397, %v399
        %v401 = vmul.f32 %v400, 1.442695
        %v402 = vpow.pop %v401
        %403 = vadd.xlane.f32.xlu0 %v402
        %v404 = vpop.xlane.xlu0 %403
        %v405 = vlog2.pop %v404
        %v406 = vmul.f32 %v405, 0.6931472
        %v407 = vadd.f32 %v399, %v406
        %v408 = vsub.f32 %v397, %v407
        %409 = vst [vmem:[%s254] sm:$0xff] %v408
        %s410 = sand.u32 %s141, 1
        %s411 = scalar_lea.sflag [#allocation4], %s410
        %s412 = sand.u32 %s141, 1
        %s413 = smul.addr %s412, 8
        %s414 = scalar_lea.vmem [#allocation7], %s413
        // Predicated region
        $region49: #{tpu_custom_call.1} parent=39 // pred_check
          %p415 = pneg %p151
        $region50: #{tpu_custom_call.1} parent=39 // pred_check_branch
          %417 = sbr.rel (%p415) target = $region52
        $region51: #{tpu_custom_call.1} parent=39 // pred_region
          %s419 = ssub.s32 128, 128
          %420 = vsyncadd %s411, %s419
          %s421 = smul.addr %s23, 128
          %s422 = scalar_lea.hbm %s5, %s421
          %s424 = sshll.u32 %s414, 4
          %s425 = int_to_ptr.vmem [resolvable:$true] %s424
          %427 = dma.vmem_to_hbm [thread:$0]  %s425, 128, %s422, %s411
        $region52: #{tpu_custom_call.1} parent=39 // pred_fallthru
          _
      $region40: #{tpu_custom_call.1} parent=5 // pred_fallthru
        _
      %p428 = scmp.le.s32.totalorder 2, %s18
      // Predicated region
      $region53: #{tpu_custom_call.1} parent=5 // pred_check
        %p429 = pneg %p428
      $region54: #{tpu_custom_call.1} parent=5 // pred_check_branch
        %431 = sbr.rel (%p429) target = $region56
      $region55: #{tpu_custom_call.1} parent=5 // pred_region
        %s432 = ssub.s32 %s18, 2
        // Predicated region
        $region57: #{tpu_custom_call.1} parent=55 // pred_check
          %p433 = pneg %p157
        $region58: #{tpu_custom_call.1} parent=55 // pred_check_branch
          %435 = sbr.rel (%p433) target = $region60
        $region59: #{tpu_custom_call.1} parent=55 // pred_region
          %s436 = sand.u32 %s142, 1
          %s437 = scalar_lea.sflag [#allocation4], %s436
          %s438 = sand.u32 %s142, 1
          %s439 = smul.addr %s438, 8
          %s440 = scalar_lea.vmem [#allocation7], %s439
          %441 = dma.done %s437, 128
        $region60: #{tpu_custom_call.1} parent=55 // pred_fallthru
          _
      $region56: #{tpu_custom_call.1} parent=5 // pred_fallthru
        _
    $region6: #{tpu_custom_call.1} parent=1 // loop_footer
      %s22 = sadd.s32 1, %s18
    $region7: #{tpu_custom_call.1} parent=1 // loop_footer_branch
      %17 = sbr.rel target = $region3
    $region8: #{tpu_custom_call.1} parent=1 // loop_exit
      _
    %442 = vsyncpa [#allocation3], 1
    %s443 = scalar_lea.sflag [#allocation3], 1
    %444 = vsyncpa %s443, 1
    %445 = vsyncpa [#allocation6], 1
    %446 = vsyncpa [#allocation4], 1
    %s447 = scalar_lea.sflag [#allocation4], 1
    %448 = vsyncpa %s447, 1

// kernel: tpu_custom_call.1
$region0: #{tpu_custom_call.1}
  #allocation0 [shape = 'u32[]', space=smem, size = 0x4, offset = 0x4, fixed_abs, tag = 'smem constant byte address 0x4 - core index']
  #allocation1 [shape = 'u32[144,128]{1,0:T(1,128)}', space=vmem, size = 0x12000, scoped, tag = 'internal scratch']
  %s0 = inlined_call_operand.hbm [shape: f32[16,32], index: 0, kind: input, shape index: {}]
  %s1 = inlined_call_operand.hbm [shape: f32[32,256], index: 1, kind: input, shape index: {}]
  %s2 = inlined_call_operand.vmem [shape: f32[1,256], index: 2, kind: input, shape index: {}]
  %s3 = inlined_call_operand.vmem [shape: f32[1,256], index: 3, kind: input, shape index: {}]
  %s4 = inlined_call_operand.vmem [shape: f32[1,256], index: 4, kind: input, shape index: {}]
  %s5 = inlined_call_operand.hbm [shape: f32[16,128], index: 5, kind: output, shape index: {}]
  %s6 = sld [smem:[#allocation0]]
  $region61: #{tpu_custom_call.1} parent=0
    _
  %s8 = ssub.s32 1, %s6
  %s9 = scalar_select 0, %s8, %s6
  $region1: #{tpu_custom_call.1} parent=0
    #allocation2 [shape = 'u8[8192]{0}', space=vmem, size = 0x2000, scoped, tag = 'input window, operand 0']
    #allocation3 [shape = 's32[2]{0}', space=sflag, size = 0x8, scoped, tag = 'scoped memory for tpu_custom_call.1']
    #allocation4 [shape = 's32[2]{0}', space=sflag, size = 0x8, scoped, tag = 'scoped memory for tpu_custom_call.1']
    #allocation5 [shape = 'u8[32768]{0}', space=vmem, size = 0x8000, scoped, tag = 'input window, operand 1, single buffered']
    #allocation6 [shape = 's32[1]{0}', space=sflag, size = 0x4, scoped, tag = 'scoped memory for tpu_custom_call.1']
    #allocation7 [shape = 'u8[8192]{0}', space=vmem, size = 0x2000, scoped, tag = 'output window, operand 0']
    %10 = vsyncpa [#allocation3], 0
    %s11 = scalar_lea.sflag [#allocation3], 1
    %12 = vsyncpa %s11, 0
    %13 = vsyncpa [#allocation6], 0
    %14 = vsyncpa [#allocation4], 0
    %s15 = scalar_lea.sflag [#allocation4], 1
    %16 = vsyncpa %s15, 0
    loop: start=0, step=1, limit=4
    $region2: #{tpu_custom_call.1} parent=1 // loop_pre_header
      _
    $region3: #{tpu_custom_call.1} parent=1 // loop_header
      %s18 = sphi 0, %s22
      %p19 = scmp.ge.s32.totalorder %s18, 4
      %s28 = sphi 0, %s30
      %s31 = sphi 0, %s28
      %s32 = sphi 0, %s31
      %s48 = sphi 0, %s32
      %s52 = sphi 0, %s52
      %s54 = sphi 0, %s52
      %s55 = sphi 0, %s54
      %s69 = sphi 0, %s55
      %s73 = sphi 0, %s73
      %s75 = sphi 0, %s73
      %s76 = sphi 0, %s75
      %s90 = sphi 0, %s76
      %s94 = sphi 0, %s94
      %s96 = sphi 0, %s94
      %s97 = sphi 0, %s96
      %s111 = sphi 0, %s97
      %s115 = sphi 0, %s115
      %s117 = sphi 0, %s115
      %s118 = sphi 0, %s117
      %s132 = sphi 0, %s118
      %s138 = sphi 0, %s140
      %s141 = sphi 0, %s138
      %s142 = sphi 0, %s141
      %s158 = sphi 0, %s142
    $region4: #{tpu_custom_call.1} parent=1 // loop_header_branch
      %21 = sbr.rel (%p19) target = $region8
    $region5: #{tpu_custom_call.1} parent=1 // loop_body
      %s23 = ssub.s32 %s18, 1
      %s24 = ssub.s32 %s18, 2
      %s25 = sadd.s32 %s18, 1
      %s26 = ssub.s32 %s18, %s25
      %p27 = scmp.eq.s32.totalorder %s26, 0
      %s29 = sadd.s32 %s28, 1
      %s30 = scalar_select %p27, %s28, %s29
      %p33 = pneg %p27
      %p34 = scmp.eq.s32.totalorder %s18, 1
      %p35 = por %p33, %p34
      %p36 = scmp.ne.s32.totalorder %s28, %s31
      %p37 = scmp.eq.s32.totalorder %s18, 0
      %p38 = por %p36, %p37
      %p39 = scmp.ne.s32.totalorder %s28, %s31
      %p40 = scmp.eq.s32.totalorder %s23, 1
      %p41 = por %p39, %p40
      %p42 = scmp.ne.s32.totalorder %s31, %s32
      %p43 = scmp.eq.s32.totalorder %s23, 0
      %p44 = por %p42, %p43
      %p45 = scmp.ne.s32.totalorder %s31, %s32
      %p46 = scmp.eq.s32.totalorder %s24, 1
      %p47 = por %p45, %p46
      %p49 = scmp.ne.s32.totalorder %s32, %s48
      %p50 = scmp.eq.s32.totalorder %s24, 0
      %p51 = por %p49, %p50
      %s53 = sadd.s32 %s52, 1
      %p56 = scmp.eq.s32.totalorder %s18, 1
      %p57 = scmp.ne.s32.totalorder %s52, %s54
      %p58 = scmp.eq.s32.totalorder %s18, 0
      %p59 = por %p57, %p58
      %p60 = scmp.ne.s32.totalorder %s52, %s54
      %p61 = scmp.eq.s32.totalorder %s23, 1
      %p62 = por %p60, %p61
      %p63 = scmp.ne.s32.totalorder %s54, %s55
      %p64 = scmp.eq.s32.totalorder %s23, 0
      %p65 = por %p63, %p64
      %p66 = scmp.ne.s32.totalorder %s54, %s55
      %p67 = scmp.eq.s32.totalorder %s24, 1
      %p68 = por %p66, %p67
      %p70 = scmp.ne.s32.totalorder %s55, %s69
      %p71 = scmp.eq.s32.totalorder %s24, 0
      %p72 = por %p70, %p71
      %s74 = sadd.s32 %s73, 1
      %p77 = scmp.eq.s32.totalorder %s18, 1
      %p78 = scmp.ne.s32.totalorder %s73, %s75
      %p79 = scmp.eq.s32.totalorder %s18, 0
      %p80 = por %p78, %p79
      %p81 = scmp.ne.s32.totalorder %s73, %s75
      %p82 = scmp.eq.s32.totalorder %s23, 1
      %p83 = por %p81, %p82
      %p84 = scmp.ne.s32.totalorder %s75, %s76
      %p85 = scmp.eq.s32.totalorder %s23, 0
      %p86 = por %p84, %p85
      %p87 = scmp.ne.s32.totalorder %s75, %s76
      %p88 = scmp.eq.s32.totalorder %s24, 1
      %p89 = por %p87, %p88
      %p91 = scmp.ne.s32.totalorder %s76, %s90
      %p92 = scmp.eq.s32.totalorder %s24, 0
      %p93 = por %p91, %p92
      %s95 = sadd.s32 %s94, 1
      %p98 = scmp.eq.s32.totalorder %s18, 1
      %p99 = scmp.ne.s32.totalorder %s94, %s96
      %p100 = scmp.eq.s32.totalorder %s18, 0
      %p101 = por %p99, %p100
      %p102 = scmp.ne.s32.totalorder %s94, %s96
      %p103 = scmp.eq.s32.totalorder %s23, 1
      %p104 = por %p102, %p103
      %p105 = scmp.ne.s32.totalorder %s96, %s97
      %p106 = scmp.eq.s32.totalorder %s23, 0
      %p107 = por %p105, %p106
      %p108 = scmp.ne.s32.totalorder %s96, %s97
      %p109 = scmp.eq.s32.totalorder %s24, 1
      %p110 = por %p108, %p109
      %p112 = scmp.ne.s32.totalorder %s97, %s111
      %p113 = scmp.eq.s32.totalorder %s24, 0
      %p114 = por %p112, %p113
      %s116 = sadd.s32 %s115, 1
      %p119 = scmp.eq.s32.totalorder %s18, 1
      %p120 = scmp.ne.s32.totalorder %s115, %s117
      %p121 = scmp.eq.s32.totalorder %s18, 0
      %p122 = por %p120, %p121
      %p123 = scmp.ne.s32.totalorder %s115, %s117
      %p124 = scmp.eq.s32.totalorder %s23, 1
      %p125 = por %p123, %p124
      %p126 = scmp.ne.s32.totalorder %s117, %s118
      %p127 = scmp.eq.s32.totalorder %s23, 0
      %p128 = por %p126, %p127
      %p129 = scmp.ne.s32.totalorder %s117, %s118
      %p130 = scmp.eq.s32.totalorder %s24, 1
      %p131 = por %p129, %p130
      %p133 = scmp.ne.s32.totalorder %s118, %s132
      %p134 = scmp.eq.s32.totalorder %s24, 0
      %p135 = por %p133, %p134
      %s136 = ssub.s32 %s18, %s25
      %p137 = scmp.eq.s32.totalorder %s136, 0
      %s139 = sadd.s32 %s138, 1
      %s140 = scalar_select %p137, %s138, %s139
      %p143 = pneg %p137
      %p144 = scmp.eq.s32.totalorder %s18, 1
      %p145 = por %p143, %p144
      %p146 = scmp.ne.s32.totalorder %s138, %s141
      %p147 = scmp.eq.s32.totalorder %s18, 0
      %p148 = por %p146, %p147
      %p149 = scmp.ne.s32.totalorder %s138, %s141
      %p150 = scmp.eq.s32.totalorder %s23, 1
      %p151 = por %p149, %p150
      %p152 = scmp.ne.s32.totalorder %s141, %s142
      %p153 = scmp.eq.s32.totalorder %s23, 0
      %p154 = por %p152, %p153
      %p155 = scmp.ne.s32.totalorder %s141, %s142
      %p156 = scmp.eq.s32.totalorder %s24, 1
      %p157 = por %p155, %p156
      %p159 = scmp.ne.s32.totalorder %s142, %s158
      %p160 = scmp.eq.s32.totalorder %s24, 0
      %p161 = por %p159, %p160
      %p162 = scmp.le.s32.totalorder 1, %s18
      %p163 = scmp.lt.s32.totalorder %s18, 3
      %p164 = pnand %p162, %p163
      %p165 = pneg %p164
      // Predicated region
      $region9: #{tpu_custom_call.1} parent=5 // pred_check
        _
      $region10: #{tpu_custom_call.1} parent=5 // pred_check_branch
        %167 = sbr.rel (%p164) target = $region12
      $region11: #{tpu_custom_call.1} parent=5 // pred_region
        %s168 = ssub.s32 %s18, 1
        // Predicated region
        $region13: #{tpu_custom_call.1} parent=11 // pred_check
          %p169 = pneg %p65
        $region14: #{tpu_custom_call.1} parent=11 // pred_check_branch
          %171 = sbr.rel (%p169) target = $region16
        $region15: #{tpu_custom_call.1} parent=11 // pred_region
          %s173 = ssub.s32 1024, 1024
          %174 = vsyncadd [#allocation6], %s173
          %s175 = sshll.u32 [#allocation5], 4
          %s176 = int_to_ptr.vmem [resolvable:$true] %s175
          %181 = dma.hbm_to_vmem [thread:$0]  %s1, 1024, %s176, [#allocation6], 256, 256, 16
        $region16: #{tpu_custom_call.1} parent=11 // pred_fallthru
          _
        // Predicated region
        $region17: #{tpu_custom_call.1} parent=11 // pred_check
          %p182 = pneg %p86
        $region18: #{tpu_custom_call.1} parent=11 // pred_check_branch
          %184 = sbr.rel (%p182) target = $region20
        $region19: #{tpu_custom_call.1} parent=11 // pred_region
          _
        $region20: #{tpu_custom_call.1} parent=11 // pred_fallthru
          _
        // Predicated region
        $region21: #{tpu_custom_call.1} parent=11 // pred_check
          %p185 = pneg %p107
        $region22: #{tpu_custom_call.1} parent=11 // pred_check_branch
          %187 = sbr.rel (%p185) target = $region24
        $region23: #{tpu_custom_call.1} parent=11 // pred_region
          _
        $region24: #{tpu_custom_call.1} parent=11 // pred_fallthru
          _
        // Predicated region
        $region25: #{tpu_custom_call.1} parent=11 // pred_check
          %p188 = pneg %p128
        $region26: #{tpu_custom_call.1} parent=11 // pred_check_branch
          %190 = sbr.rel (%p188) target = $region28
        $region27: #{tpu_custom_call.1} parent=11 // pred_region
          _
        $region28: #{tpu_custom_call.1} parent=11 // pred_fallthru
          _
      $region12: #{tpu_custom_call.1} parent=5 // pred_fallthru
        _
      %p191 = scmp.lt.s32.totalorder %s18, 2
      // Predicated region
      $region29: #{tpu_custom_call.1} parent=5 // pred_check
        %p192 = pneg %p191
      $region30: #{tpu_custom_call.1} parent=5 // pred_check_branch
        %194 = sbr.rel (%p192) target = $region32
      $region31: #{tpu_custom_call.1} parent=5 // pred_region
        // Predicated region
        $region33: #{tpu_custom_call.1} parent=31 // pred_check
          %p195 = pneg %p38
        $region34: #{tpu_custom_call.1} parent=31 // pred_check_branch
          %197 = sbr.rel (%p195) target = $region36
        $region35: #{tpu_custom_call.1} parent=31 // pred_region
          %s198 = sand.u32 %s28, 1
          %s199 = scalar_lea.sflag [#allocation3], %s198
          %s200 = sand.u32 %s28, 1
          %s201 = smul.addr %s200, 8
          %s202 = scalar_lea.vmem [#allocation2], %s201
          %s204 = ssub.s32 128, 128
          %205 = vsyncadd %s199, %s204
          %s206 = smul.addr %s18, 128
          %s207 = scalar_lea.hbm %s0, %s206
          %s209 = sshll.u32 %s202, 4
          %s210 = int_to_ptr.vmem [resolvable:$true] %s209
          %212 = dma.hbm_to_vmem [thread:$0]  %s207, 128, %s210, %s199
        $region36: #{tpu_custom_call.1} parent=31 // pred_fallthru
          _
      $region32: #{tpu_custom_call.1} parent=5 // pred_fallthru
        _
      %p213 = scmp.le.s32.totalorder 1, %s18
      %p214 = scmp.lt.s32.totalorder %s18, 3
      %p215 = pnand %p213, %p214
      %p216 = pneg %p215
      // Predicated region
      $region37: #{tpu_custom_call.1} parent=5 // pred_check
        _
      $region38: #{tpu_custom_call.1} parent=5 // pred_check_branch
        %218 = sbr.rel (%p215) target = $region40
      $region39: #{tpu_custom_call.1} parent=5 // pred_region
        %s219 = ssub.s32 %s18, 1
        %s220 = sand.u32 %s31, 1
        %s221 = scalar_lea.sflag [#allocation3], %s220
        %s222 = sand.u32 %s31, 1
        %s223 = smul.addr %s222, 8
        %s224 = scalar_lea.vmem [#allocation2], %s223
        // Predicated region
        $region41: #{tpu_custom_call.1} parent=39 // pred_check
          %p225 = pneg %p44
        $region42: #{tpu_custom_call.1} parent=39 // pred_check_branch
          %227 = sbr.rel (%p225) target = $region44
        $region43: #{tpu_custom_call.1} parent=39 // pred_region
          %228 = dma.done %s221, 128
        $region44: #{tpu_custom_call.1} parent=39 // pred_fallthru
          _
        // Predicated region
        $region45: #{tpu_custom_call.1} parent=39 // pred_check
          %p229 = pneg %p65
        $region46: #{tpu_custom_call.1} parent=39 // pred_check_branch
          %231 = sbr.rel (%p229) target = $region48
        $region47: #{tpu_custom_call.1} parent=39 // pred_region
          %232 = dma.done [#allocation6], 1024
        $region48: #{tpu_custom_call.1} parent=39 // pred_fallthru
          _
        %s233 = sand.u32 %s31, 1
        %s234 = scalar_lea.sflag [#allocation3], %s233
        %s235 = sand.u32 %s31, 1
        %s236 = smul.addr %s235, 8
        %s237 = scalar_lea.vmem [#allocation2], %s236
        %p238 = pneg %p44
        %p239 = pneg %p41
        %p240 = pneg %p65
        %p241 = pneg %p62
        %p242 = pneg %p86
        %p243 = pneg %p83
        %p244 = pneg %p107
        %p245 = pneg %p104
        %p246 = pneg %p128
        %p247 = pneg %p125
        %p248 = pneg %p154
        %p249 = pneg %p151
        %s250 = sand.u32 %s141, 1
        %s251 = scalar_lea.sflag [#allocation4], %s250
        %s252 = sand.u32 %s141, 1
        %s253 = smul.addr %s252, 8
        %s254 = scalar_lea.vmem [#allocation7], %s253
        %v255 = vld [vmem:[%s224] sm:$0xff]
        %v256 = vmul.f32 %v255, %v255
        %vm257 = vcmask 261120
        %v258 = vsel %vm257, %v256, 0.0
        %259 = vadd.xlane.f32.xlu0 %v258
        %v260 = vpop.xlane.xlu0 %259
        %v261 = vld [vmem:[#allocation5] sm:$0xff]
        %v262 = vld [vmem:[#allocation5 + $0x8] sm:$0xff]
        %v263 = vld [vmem:[#allocation5 + $0x10] sm:$0xff]
        %v264 = vld [vmem:[#allocation5 + $0x18] sm:$0xff]
        %v265 = vld [vmem:[#allocation5 + $0x20] sm:$0xff]
        %v266 = vld [vmem:[#allocation5 + $0x28] sm:$0xff]
        %v267 = vld [vmem:[#allocation5 + $0x30] sm:$0xff]
        %v268 = vld [vmem:[#allocation5 + $0x38] sm:$0xff]
        %v270 = vsel %vm257, %v255, 0
        %272 = vmatprep.subr.mxu0 %v262
        %273 = vmatpush1.msra.mxu0 %v261
        %274 = vmatprep.subr.mxu0 %v264
        %275 = vmatpush1.msra.mxu0 %v263
        %276 = vmatprep.subr.mxu0 %v266
        %277 = vmatpush1.msra.mxu0 %v265
        %278 = vmatprep.subr.mxu0 %v268
        %279 = vmatpush1.msra.mxu0 %v267
        %280 = vmatprep.subr.mxu0 0.0
        %281 = vmatpush1.msra.mxu0 0.0
        %282 = vmatprep.subr.mxu0 0.0
        %283 = vmatpush1.msra.mxu0 0.0
        %284 = vmatprep.subr.mxu0 0.0
        %285 = vmatpush1.msra.mxu0 0.0
        %286 = vmatprep.subr.mxu0 0.0
        %287 = vmatpush1.msra.mxu0 0.0
        %288 = vmatprep.subr.mxu0 0.0
        %289 = vmatpush1.msra.mxu0 0.0
        %290 = vmatprep.subr.mxu0 0.0
        %291 = vmatpush1.msra.mxu0 0.0
        %292 = vmatprep.subr.mxu0 0.0
        %293 = vmatpush1.msra.mxu0 0.0
        %294 = vmatprep.subr.mxu0 0.0
        %295 = vmatpush1.msra.mxu0 0.0
        %296 = vmatprep.subr.mxu0 0.0
        %297 = vmatpush1.msra.mxu0 0.0
        %298 = vmatprep.subr.mxu0 0.0
        %299 = vmatpush1.msra.mxu0 0.0
        %300 = vmatprep.subr.mxu0 0.0
        %301 = vmatpush1.msra.mxu0 0.0
        %302 = vmatprep.subr.mxu0 0.0
        %303 = vmatpush1.msra.mxu0 0.0
        %304 = vmatprep.subr.mxu0 0.0
        %305 = vmatpush1.msra.mxu0 0.0
        %306 = vmatprep.subr.mxu0 0.0
        %307 = vmatpush1.msra.mxu0 0.0
        %308 = vmatprep.subr.mxu0 0.0
        %309 = vmatpush1.msra.mxu0 0.0
        %310 = vmatprep.subr.mxu0 0.0
        %311 = vmatpush1.msra.mxu0 0.0
        %312 = vmatprep.subr.mxu0 0.0
        %313 = vmatpush1.msra.mxu0 0.0
        %314 = vmatprep.subr.mxu0 0.0
        %315 = vmatpush1.msra.mxu0 0.0
        %316 = vmatprep.subr.mxu0 0.0
        %317 = vmatpush1.msra.mxu0 0.0
        %318 = vmatprep.subr.mxu0 0.0
        %319 = vmatpush1.msra.mxu0 0.0
        %320 = vmatprep.subr.mxu0 0.0
        %321 = vmatpush1.msra.mxu0 0.0
        %322 = vmatprep.subr.mxu0 0.0
        %323 = vmatpush1.msra.mxu0 0.0
        %324 = vmatprep.subr.mxu0 0.0
        %325 = vmatpush1.msra.mxu0 0.0
        %326 = vmatprep.subr.mxu0 0.0
        %327 = vmatpush1.msra.mxu0 0.0
        %328 = vmatprep.subr.mxu0 0.0
        %329 = vmatpush1.msra.mxu0 0.0
        %330 = vmatprep.subr.mxu0 0.0
        %331 = vmatpush1.msra.mxu0 0.0
        %332 = vmatprep.subr.mxu0 0.0
        %333 = vmatpush1.msra.mxu0 0.0
        %334 = vmatprep.subr.mxu0 0.0
        %335 = vmatpush1.msra.mxu0 0.0
        %336 = vmatprep.mubr.f32.mxu0 0.0
        %337 = vmatmul.mubr.f32.gmra.mrb[0].mxu0 %v270
        %v338 = vpop.f32.mrb[0].mxu0
        %v339 = vadd.f32 0.0, %v338
        %v340 = vpop.f32.mrb[0].mxu0
        %v341 = vadd.f32 0.0, %v340
        %342 = vdwg.mxu0
        %v343 = vld [vmem:[%s2] sm:$0x3]
        %v344 = vld [vmem:[%s3] sm:$0x3]
        %v346 = vlaneseq
        %v347 = vshrl.u32 %v346, 7
        %v348 = vsub.s32 0, %v347
        %v349 = vrot.slane %v344, %v348
        %v350 = vlaneseq
        %v351 = vshrl.u32 %v350, 7
        %v352 = vsub.s32 1, %v351
        %v353 = vrot.slane %v344, %v352
        %v356 = vmul.f32 %v349, %v260
        %v357 = vmul.f32 %v353, %v260
        %v359 = vlaneseq
        %v360 = vshrl.u32 %v359, 7
        %v361 = vsub.s32 0, %v360
        %v362 = vrot.slane %v343, %v361
        %v363 = vlaneseq
        %v364 = vshrl.u32 %v363, 7
        %v365 = vsub.s32 1, %v364
        %v366 = vrot.slane %v343, %v365
        %v369 = vadd.f32 %v362, %v356
        %v370 = vadd.f32 %v366, %v357
        %v371 = vadd.f32 %v369, %v339
        %v372 = vadd.f32 %v370, %v341
        %v373 = vld [vmem:[%s4] sm:$0x3]
        %v375 = vlaneseq
        %v376 = vshrl.u32 %v375, 7
        %v377 = vsub.s32 0, %v376
        %v378 = vrot.slane %v373, %v377
        %v379 = vlaneseq
        %v380 = vshrl.u32 %v379, 7
        %v381 = vsub.s32 1, %v380
        %v382 = vrot.slane %v373, %v381
        %v385 = vmin.f32 %v371, %v378
        %v386 = vmin.f32 %v372, %v382
        %v387 = vmax.f32 %v385, %v386
        %v388 = vsub.f32 %v385, %v387
        %v389 = vmul.f32 %v388, 1.442695
        %v390 = vpow.pop %v389
        %v391 = vsub.f32 %v386, %v387
        %v392 = vmul.f32 %v391, 1.442695
        %v393 = vpow.pop %v392
        %v394 = vadd.f32 %v390, %v393
        %v395 = vlog2.pop %v394
        %v396 = vmul.f32 %v395, 0.6931472
        %v397 = vadd.f32 %v387, %v396
        %398 = vmax.xlane.f32.xlu0 %v397
        %v399 = vpop.xlane.xlu0 %398
        %v400 = vsub.f32 %v397, %v399
        %v401 = vmul.f32 %v400, 1.442695
        %v402 = vpow.pop %v401
        %403 = vadd.xlane.f32.xlu0 %v402
        %v404 = vpop.xlane.xlu0 %403
        %v405 = vlog2.pop %v404
        %v406 = vmul.f32 %v405, 0.6931472
        %v407 = vadd.f32 %v399, %v406
        %v408 = vsub.f32 %v397, %v407
        %409 = vst [vmem:[%s254] sm:$0xff] %v408
        %s410 = sand.u32 %s141, 1
        %s411 = scalar_lea.sflag [#allocation4], %s410
        %s412 = sand.u32 %s141, 1
        %s413 = smul.addr %s412, 8
        %s414 = scalar_lea.vmem [#allocation7], %s413
        // Predicated region
        $region49: #{tpu_custom_call.1} parent=39 // pred_check
          %p415 = pneg %p151
        $region50: #{tpu_custom_call.1} parent=39 // pred_check_branch
          %417 = sbr.rel (%p415) target = $region52
        $region51: #{tpu_custom_call.1} parent=39 // pred_region
          %s419 = ssub.s32 128, 128
          %420 = vsyncadd %s411, %s419
          %s421 = smul.addr %s23, 128
          %s422 = scalar_lea.hbm %s5, %s421
          %s424 = sshll.u32 %s414, 4
          %s425 = int_to_ptr.vmem [resolvable:$true] %s424
          %427 = dma.vmem_to_hbm [thread:$0]  %s425, 128, %s422, %s411
        $region52: #{tpu_custom_call.1} parent=39 // pred_fallthru
          _
      $region40: #{tpu_custom_call.1} parent=5 // pred_fallthru
        _
      %p428 = scmp.le.s32.totalorder 2, %s18
      // Predicated region
      $region53: #{tpu_custom_call.1} parent=5 // pred_check
        %p429 = pneg %p428
      $region54: #{tpu_custom_call.1} parent=5 // pred_check_branch
        %431 = sbr.rel (%p429) target = $region56
      $region55: #{tpu_custom_call.1} parent=5 // pred_region
        %s432 = ssub.s32 %s18, 2
        // Predicated region
        $region57: #{tpu_custom_call.1} parent=55 // pred_check
          %p433 = pneg %p157
        $region58: #{tpu_custom_call.1} parent=55 // pred_check_branch
          %435 = sbr.rel (%p433) target = $region60
        $region59: #{tpu_custom_call.1} parent=55 // pred_region
          %s436 = sand.u32 %s142, 1
          %s437 = scalar_lea.sflag [#allocation4], %s436
          %s438 = sand.u32 %s142, 1
          %s439 = smul.addr %s438, 8
          %s440 = scalar_lea.vmem [#allocation7], %s439
          %441 = dma.done %s437, 128
        $region60: #{tpu_custom_call.1} parent=55 // pred_fallthru
          _
      $region56: #{tpu_custom_call.1} parent=5 // pred_fallthru
        _
    $region6: #{tpu_custom_call.1} parent=1 // loop_footer
      %s22 = sadd.s32 1, %s18
    $region7: #{tpu_custom_call.1} parent=1 // loop_footer_branch
      %17 = sbr.rel target = $region3
    $region8: #{tpu_custom_call.1} parent=1 // loop_exit
      _
    %442 = vsyncpa [#allocation3], 1
    %s443 = scalar_lea.sflag [#allocation3], 1
    %444 = vsyncpa %s443, 1
    %445 = vsyncpa [#allocation6], 1
    %446 = vsyncpa [#allocation4], 1
    %s447 = scalar_lea.sflag [#allocation4], 1
    %448 = vsyncpa %s447, 1

</llo_original>
